<compile_context>
chip_gen: v5e
topology: v5e:2x2
jax: 0.10.0
libtpu: 0.0.40
codegen_flags: <defaults>
</compile_context>

<pallas_src>
import functools

import jax
import jax.numpy as jnp
from jax.experimental import pallas as pl
from jax.experimental.pallas import tpu as pltpu


def _round_up(x, m):
    return (x + m - 1) // m * m


# -----------------------------------------------------------------------------
# Kernel
# -----------------------------------------------------------------------------
def fcn_kernel(x_ref, w_in_ref, b_in_ref, w_h_ref, b_h_ref,
               w_out_ref, b_out_ref, o_ref, h_scratch, *, n_hidden_layers):
    cd = h_scratch.dtype  # compute dtype for MXU inputs (bf16)

    # --- input layer: h = tanh(x @ W_in + b_in) ---  (f32 accumulate + f32 tanh)
    h = jnp.tanh(
        jnp.dot(x_ref[...], w_in_ref[...], preferred_element_type=jnp.float32)
        + b_in_ref[...])
    h_scratch[...] = h.astype(cd)

    # --- hidden layers (statically unrolled): h = tanh(h @ W_h[l] + b_h[l]) ---
    for l in range(n_hidden_layers):
        h = jnp.tanh(
            jnp.dot(h_scratch[...], w_h_ref[l],
                    preferred_element_type=jnp.float32)
            + b_h_ref[l])
        h_scratch[...] = h.astype(cd)

    # --- output layer (no activation): o = h @ W_out + b_out ---
    o_ref[...] = (
        jnp.dot(h_scratch[...], w_out_ref[...],
                preferred_element_type=jnp.float32)
        + b_out_ref[...]).astype(o_ref.dtype)


# -----------------------------------------------------------------------------
# One-time parameter preparation (padding + bf16 cast)
# -----------------------------------------------------------------------------
def prepare_fcn_params(params, compute_dtype=jnp.bfloat16):
    w_in, b_in, w_h, b_h, w_out, b_out = params
    n_in, n_hid = w_in.shape
    n_out = w_out.shape[1]
    n_hidden_layers = w_h.shape[0]

    INp = _round_up(n_in, 128)
    Hp = _round_up(n_hid, 128)
    OUTp = _round_up(n_out, 128)

    cd = compute_dtype
    f32 = jnp.float32

    w_in_p = jnp.zeros((INp, Hp), cd).at[:n_in, :n_hid].set(w_in.astype(cd))
    b_in_p = jnp.zeros((1, Hp), f32).at[0, :n_hid].set(b_in.astype(f32))

    if n_hidden_layers > 0:
        w_h_p = (jnp.zeros((n_hidden_layers, Hp, Hp), cd)
                 .at[:, :n_hid, :n_hid].set(w_h.astype(cd)))
        b_h_p = (jnp.zeros((n_hidden_layers, 1, Hp), f32)
                 .at[:, 0, :n_hid].set(b_h.astype(f32)))
    else:
        # dummy (never read: the kernel's unrolled loop has zero iterations)
        w_h_p = jnp.zeros((1, Hp, Hp), cd)
        b_h_p = jnp.zeros((1, 1, Hp), f32)

    w_out_p = jnp.zeros((Hp, OUTp), cd).at[:n_hid, :n_out].set(w_out.astype(cd))
    b_out_p = jnp.zeros((1, OUTp), f32).at[0, :n_out].set(b_out.astype(f32))

    return dict(w_in=w_in_p, b_in=b_in_p, w_h=w_h_p, b_h=b_h_p,
                w_out=w_out_p, b_out=b_out_p,
                n_in=n_in, n_out=n_out,
                n_hidden_layers=n_hidden_layers,
                compute_dtype=cd)


# -----------------------------------------------------------------------------
# Forward pass
# -----------------------------------------------------------------------------
def fcn_apply(x, prepared):
    """Runs the fused FCN forward pass in a single Pallas kernel call."""
    B, n_in = x.shape
    assert n_in == prepared["n_in"]

    cd = prepared["compute_dtype"]
    w_in_p, b_in_p = prepared["w_in"], prepared["b_in"]
    w_h_p, b_h_p = prepared["w_h"], prepared["b_h"]
    w_out_p, b_out_p = prepared["w_out"], prepared["b_out"]
    n_hidden_layers = prepared["n_hidden_layers"]

    INp, Hp = w_in_p.shape
    OUTp = w_out_p.shape[1]
    Lw = w_h_p.shape[0]

    # Batch tiling: one tile if small, 256-row tiles otherwise (fills the
    # 256-wide v6e/v7x MXU; fine on v5e too).
    if B <= 256:
        tm = _round_up(B, 8)
        Bp = tm
    else:
        tm = 256
        Bp = _round_up(B, tm)
    grid = (Bp // tm,)

    # Per-call input padding only.
    xp = jnp.zeros((Bp, INp), cd).at[:B, :n_in].set(x.astype(cd))

    # Scoped-VMEM budget: resident weights + double-buffered x/out tiles +
    # activation scratch, with headroom.  Clamp to [32 MiB, 64 MiB] so it is
    # safe on v5e/v6e/v7x alike.
    itm = jnp.dtype(cd).itemsize
    weight_bytes = sum(a.size * a.dtype.itemsize
                       for a in (w_in_p, b_in_p, w_h_p, b_h_p, w_out_p, b_out_p))
    tile_bytes = 2 * tm * INp * itm + 2 * tm * OUTp * 4 + tm * Hp * itm
    vmem_bytes = int(2 * (weight_bytes + tile_bytes)) + (1 << 20)
    vmem_bytes = min(64 * 1024 * 1024, max(32 * 1024 * 1024, vmem_bytes))

    kernel = functools.partial(fcn_kernel, n_hidden_layers=n_hidden_layers)

    out_p = pl.pallas_call(
        kernel,
        out_shape=jax.ShapeDtypeStruct((Bp, OUTp), jnp.float32),
        grid=grid,
        in_specs=[
            # batch-tiled input (double-buffered across grid steps)
            pl.BlockSpec((tm, INp), lambda i: (i, 0)),
            # weights / biases: constant index_map -> DMA'd once, VMEM-resident
            pl.BlockSpec((INp, Hp), lambda i: (0, 0)),
            pl.BlockSpec((1, Hp), lambda i: (0, 0)),
            pl.BlockSpec((Lw, Hp, Hp), lambda i: (0, 0, 0)),
            pl.BlockSpec((Lw, 1, Hp), lambda i: (0, 0, 0)),
            pl.BlockSpec((Hp, OUTp), lambda i: (0, 0)),
            pl.BlockSpec((1, OUTp), lambda i: (0, 0)),
        ],
        out_specs=pl.BlockSpec((tm, OUTp), lambda i: (i, 0)),
        scratch_shapes=[pltpu.VMEM((tm, Hp), cd)],
        compiler_params=pltpu.CompilerParams(
            dimension_semantics=("parallel",),   # megacore sharding on v7x
            vmem_limit_bytes=vmem_bytes),
    )(xp, w_in_p, b_in_p, w_h_p, b_h_p, w_out_p, b_out_p)

    return out_p[:B, :prepared["n_out"]]


# -----------------------------------------------------------------------------
# Parameter init (mimics PyTorch nn.Linear default: U(+/- 1/sqrt(fan_in)))
# -----------------------------------------------------------------------------
def init_fcn_params(key, n_input, n_output, n_hidden, n_layers):
    """Weights stored (in_features, out_features)."""
    keys = jax.random.split(key, 2 * (n_layers + 1))

    def linear(kw, kb, fan_in, fan_out):
        bound = 1.0 / jnp.sqrt(fan_in)
        w = jax.random.uniform(kw, (fan_in, fan_out), jnp.float32, -bound, bound)
        b = jax.random.uniform(kb, (fan_out,), jnp.float32, -bound, bound)
        return w, b

    w_in, b_in = linear(keys[0], keys[1], n_input, n_hidden)

    n_h = max(n_layers - 1, 0)
    if n_h > 0:
        w_hs, b_hs = [], []
        for i in range(n_h):
            w, b = linear(keys[2 + 2 * i], keys[3 + 2 * i], n_hidden, n_hidden)
            w_hs.append(w)
            b_hs.append(b)
        w_h = jnp.stack(w_hs, axis=0)   # (n_layers-1, H, H)
        b_h = jnp.stack(b_hs, axis=0)   # (n_layers-1, H)
    else:
        w_h = jnp.zeros((0, n_hidden, n_hidden), jnp.float32)
        b_h = jnp.zeros((0, n_hidden), jnp.float32)

    w_out, b_out = linear(keys[2 * n_layers], keys[2 * n_layers + 1],
                          n_hidden, n_output)
    return (w_in, b_in, w_h, b_h, w_out, b_out)


# -----------------------------------------------------------------------------
# References for validation
# -----------------------------------------------------------------------------
def fcn_reference(x, params):
    """Pure-f32 JAX reference of the PyTorch FCN.forward."""
    w_in, b_in, w_h, b_h, w_out, b_out = params
    h = jnp.tanh(x @ w_in + b_in)
    for l in range(w_h.shape[0]):
        h = jnp.tanh(h @ w_h[l] + b_h[l])
    return h @ w_out + b_out


def fcn_reference_mixed(x, params, compute_dtype=jnp.bfloat16):
    """Reference that emulates the kernel's bf16-input / f32-accumulate matmuls."""
    w_in, b_in, w_h, b_h, w_out, b_out = params

    def lin(h, w, b):
        return jnp.dot(h.astype(compute_dtype), w.astype(compute_dtype),
                       preferred_element_type=jnp.float32) + b

    h = jnp.tanh(lin(x, w_in, b_in))
    for l in range(w_h.shape[0]):
        h = jnp.tanh(lin(h, w_h[l], b_h[l]))
    return lin(h, w_out, b_out)


# -----------------------------------------------------------------------------
# Demo / self-test
# -----------------------------------------------------------------------------
if __name__ == "__main__":
    N_INPUT, N_OUTPUT, N_HIDDEN, N_LAYERS = 2, 1, 32, 3
    BATCH = 16

    key = jax.random.PRNGKey(0)
    k_x, k_p = jax.random.split(key)
    x = jax.random.normal(k_x, (BATCH, N_INPUT), dtype=jnp.float32)
    params = init_fcn_params(k_p, N_INPUT, N_OUTPUT, N_HIDDEN, N_LAYERS)

    prepared = prepare_fcn_params(params)          # one-time padding / bf16 cast
    out = fcn_apply(x, prepared)
    out = jax.block_until_ready(out)

    assert out.shape == (BATCH, N_OUTPUT)

    # Tight check vs. a reference computing the identical bf16-in / f32-acc math.
    ref_mixed = fcn_reference_mixed(x, params)
    assert jnp.allclose(out, ref_mixed, atol=1e-4, rtol=1e-4), \
        "mismatch vs mixed-precision reference"

    # Loose check vs. the pure-f32 PyTorch-semantics reference (bf16 drift).
    ref_f32 = fcn_reference(x, params)
    assert jnp.allclose(out, ref_f32, atol=5e-2, rtol=5e-2), \
        "mismatch vs f32 reference"

    print("KERNEL_OK")
</pallas_src>

<mosaic_0001>
module attributes {stable_mosaic.version = 11 : i64} {
  func.func @fcn_kernel(%arg0: i32, %arg1: memref<16x128xbf16, #tpu.memory_space<vmem>>, %arg2: memref<128x128xbf16, #tpu.memory_space<vmem>>, %arg3: memref<1x128xf32, #tpu.memory_space<vmem>>, %arg4: memref<2x128x128xbf16, #tpu.memory_space<vmem>>, %arg5: memref<2x1x128xf32, #tpu.memory_space<vmem>>, %arg6: memref<128x128xbf16, #tpu.memory_space<vmem>>, %arg7: memref<1x128xf32, #tpu.memory_space<vmem>>, %arg8: memref<16x128xf32, #tpu.memory_space<vmem>>, %arg9: memref<16x128xbf16, #tpu.memory_space<vmem>>) attributes {dimension_semantics = [#tpu.dimension_semantics<parallel>], iteration_bounds = array<i64: 1>, scalar_prefetch = 0 : i64, scratch_operands = 1 : i64, tpu.core_type = #tpu.core_type<tc>, window_params = [{transform_indices = @transform_0, window_bounds = array<i64: 16, 128>}, {pipeline_mode = #tpu.pipeline_mode<synchronous>, transform_indices = @transform_1, window_bounds = array<i64: 128, 128>}, {pipeline_mode = #tpu.pipeline_mode<synchronous>, transform_indices = @transform_2, window_bounds = array<i64: 1, 128>}, {pipeline_mode = #tpu.pipeline_mode<synchronous>, transform_indices = @transform_3, window_bounds = array<i64: 2, 128, 128>}, {pipeline_mode = #tpu.pipeline_mode<synchronous>, transform_indices = @transform_4, window_bounds = array<i64: 2, 1, 128>}, {pipeline_mode = #tpu.pipeline_mode<synchronous>, transform_indices = @transform_5, window_bounds = array<i64: 128, 128>}, {pipeline_mode = #tpu.pipeline_mode<synchronous>, transform_indices = @transform_6, window_bounds = array<i64: 1, 128>}, {transform_indices = @transform_7, window_bounds = array<i64: 16, 128>}]} {
    %c0 = arith.constant 0 : index
    %c0_0 = arith.constant 0 : index
    %0 = vector.load %arg1[%c0, %c0_0] : memref<16x128xbf16, #tpu.memory_space<vmem>>, vector<16x128xbf16>
    %c0_1 = arith.constant 0 : index
    %c0_2 = arith.constant 0 : index
    %1 = vector.load %arg2[%c0_1, %c0_2] : memref<128x128xbf16, #tpu.memory_space<vmem>>, vector<128x128xbf16>
    %cst = arith.constant dense<0.000000e+00> : vector<16x128xf32>
    %2 = tpu.matmul %0, %1, %cst {dimension_numbers = #tpu.dot_dimension_numbers<[1], [0], [0], [1], [0, 0, 1, 1], [], []>} : vector<16x128xbf16>, vector<128x128xbf16>, vector<16x128xf32> -> vector<16x128xf32>
    %c0_3 = arith.constant 0 : index
    %c0_4 = arith.constant 0 : index
    %3 = vector.load %arg3[%c0_3, %c0_4] : memref<1x128xf32, #tpu.memory_space<vmem>>, vector<1x128xf32>
    %4 = vector.broadcast %3 : vector<1x128xf32> to vector<16x128xf32>
    %5 = arith.addf %2, %4 : vector<16x128xf32>
    %6 = math.tanh %5 : vector<16x128xf32>
    %7 = arith.truncf %6 : vector<16x128xf32> to vector<16x128xbf16>
    %c0_5 = arith.constant 0 : index
    %c0_6 = arith.constant 0 : index
    %8 = vector.load %arg9[%c0_5, %c0_6] : memref<16x128xbf16, #tpu.memory_space<vmem>>, vector<16x128xbf16>
    tpu.vector_store %arg9[%c0_5, %c0_6], %7 {strides = array<i32>} : memref<16x128xbf16, #tpu.memory_space<vmem>>, vector<16x128xbf16>,
    %c0_7 = arith.constant 0 : index
    %c0_8 = arith.constant 0 : index
    %9 = vector.load %arg9[%c0_7, %c0_8] : memref<16x128xbf16, #tpu.memory_space<vmem>>, vector<16x128xbf16>
    %c0_9 = arith.constant 0 : index
    %c0_10 = arith.constant 0 : index
    %c0_11 = arith.constant 0 : index
    %10 = vector.load %arg4[%c0_9, %c0_10, %c0_11] : memref<2x128x128xbf16, #tpu.memory_space<vmem>>, vector<1x128x128xbf16>
    %11 = vector.shape_cast %10 : vector<1x128x128xbf16> to vector<128x128xbf16>
    %cst_12 = arith.constant dense<0.000000e+00> : vector<16x128xf32>
    %12 = tpu.matmul %9, %11, %cst_12 {dimension_numbers = #tpu.dot_dimension_numbers<[1], [0], [0], [1], [0, 0, 1, 1], [], []>} : vector<16x128xbf16>, vector<128x128xbf16>, vector<16x128xf32> -> vector<16x128xf32>
    %c0_13 = arith.constant 0 : index
    %c0_14 = arith.constant 0 : index
    %c0_15 = arith.constant 0 : index
    %13 = vector.load %arg5[%c0_13, %c0_14, %c0_15] : memref<2x1x128xf32, #tpu.memory_space<vmem>>, vector<1x1x128xf32>
    %14 = vector.shape_cast %13 : vector<1x1x128xf32> to vector<1x128xf32>
    %15 = vector.broadcast %14 : vector<1x128xf32> to vector<16x128xf32>
    %16 = arith.addf %12, %15 : vector<16x128xf32>
    %17 = math.tanh %16 : vector<16x128xf32>
    %18 = arith.truncf %17 : vector<16x128xf32> to vector<16x128xbf16>
    %c0_16 = arith.constant 0 : index
    %c0_17 = arith.constant 0 : index
    %19 = vector.load %arg9[%c0_16, %c0_17] : memref<16x128xbf16, #tpu.memory_space<vmem>>, vector<16x128xbf16>
    tpu.vector_store %arg9[%c0_16, %c0_17], %18 {strides = array<i32>} : memref<16x128xbf16, #tpu.memory_space<vmem>>, vector<16x128xbf16>,
    %c0_18 = arith.constant 0 : index
    %c0_19 = arith.constant 0 : index
    %20 = vector.load %arg9[%c0_18, %c0_19] : memref<16x128xbf16, #tpu.memory_space<vmem>>, vector<16x128xbf16>
    %c1 = arith.constant 1 : index
    %c0_20 = arith.constant 0 : index
    %c0_21 = arith.constant 0 : index
    %21 = vector.load %arg4[%c1, %c0_20, %c0_21] : memref<2x128x128xbf16, #tpu.memory_space<vmem>>, vector<1x128x128xbf16>
    %22 = vector.shape_cast %21 : vector<1x128x128xbf16> to vector<128x128xbf16>
    %cst_22 = arith.constant dense<0.000000e+00> : vector<16x128xf32>
    %23 = tpu.matmul %20, %22, %cst_22 {dimension_numbers = #tpu.dot_dimension_numbers<[1], [0], [0], [1], [0, 0, 1, 1], [], []>} : vector<16x128xbf16>, vector<128x128xbf16>, vector<16x128xf32> -> vector<16x128xf32>
    %c1_23 = arith.constant 1 : index
    %c0_24 = arith.constant 0 : index
    %c0_25 = arith.constant 0 : index
    %24 = vector.load %arg5[%c1_23, %c0_24, %c0_25] : memref<2x1x128xf32, #tpu.memory_space<vmem>>, vector<1x1x128xf32>
    %25 = vector.shape_cast %24 : vector<1x1x128xf32> to vector<1x128xf32>
    %26 = vector.broadcast %25 : vector<1x128xf32> to vector<16x128xf32>
    %27 = arith.addf %23, %26 : vector<16x128xf32>
    %28 = math.tanh %27 : vector<16x128xf32>
    %29 = arith.truncf %28 : vector<16x128xf32> to vector<16x128xbf16>
    %c0_26 = arith.constant 0 : index
    %c0_27 = arith.constant 0 : index
    %30 = vector.load %arg9[%c0_26, %c0_27] : memref<16x128xbf16, #tpu.memory_space<vmem>>, vector<16x128xbf16>
    tpu.vector_store %arg9[%c0_26, %c0_27], %29 {strides = array<i32>} : memref<16x128xbf16, #tpu.memory_space<vmem>>, vector<16x128xbf16>,
    %c0_28 = arith.constant 0 : index
    %c0_29 = arith.constant 0 : index
    %31 = vector.load %arg9[%c0_28, %c0_29] : memref<16x128xbf16, #tpu.memory_space<vmem>>, vector<16x128xbf16>
    %c0_30 = arith.constant 0 : index
    %c0_31 = arith.constant 0 : index
    %32 = vector.load %arg6[%c0_30, %c0_31] : memref<128x128xbf16, #tpu.memory_space<vmem>>, vector<128x128xbf16>
    %cst_32 = arith.constant dense<0.000000e+00> : vector<16x128xf32>
    %33 = tpu.matmul %31, %32, %cst_32 {dimension_numbers = #tpu.dot_dimension_numbers<[1], [0], [0], [1], [0, 0, 1, 1], [], []>} : vector<16x128xbf16>, vector<128x128xbf16>, vector<16x128xf32> -> vector<16x128xf32>
    %c0_33 = arith.constant 0 : index
    %c0_34 = arith.constant 0 : index
    %34 = vector.load %arg7[%c0_33, %c0_34] : memref<1x128xf32, #tpu.memory_space<vmem>>, vector<1x128xf32>
    %35 = vector.broadcast %34 : vector<1x128xf32> to vector<16x128xf32>
    %36 = arith.addf %33, %35 : vector<16x128xf32>
    %c0_35 = arith.constant 0 : index
    %c0_36 = arith.constant 0 : index
    %37 = vector.load %arg8[%c0_35, %c0_36] : memref<16x128xf32, #tpu.memory_space<vmem>>, vector<16x128xf32>
    tpu.vector_store %arg8[%c0_35, %c0_36], %36 {strides = array<i32>} : memref<16x128xf32, #tpu.memory_space<vmem>>, vector<16x128xf32>,
    return
  }
  func.func @transform_0(%arg0: i32) -> (i32, i32) {
    %c0_i32 = arith.constant 0 : i32
    %c0_i32_0 = arith.constant 0 : i32
    return %arg0, %c0_i32 : i32, i32
  }
  func.func @transform_1(%arg0: i32) -> (i32, i32) {
    %c0_i32 = arith.constant 0 : i32
    %c0_i32_0 = arith.constant 0 : i32
    %c0_i32_1 = arith.constant 0 : i32
    return %c0_i32, %c0_i32_0 : i32, i32
  }
  func.func @transform_2(%arg0: i32) -> (i32, i32) {
    %c0_i32 = arith.constant 0 : i32
    %c0_i32_0 = arith.constant 0 : i32
    %c0_i32_1 = arith.constant 0 : i32
    return %c0_i32, %c0_i32_0 : i32, i32
  }
  func.func @transform_3(%arg0: i32) -> (i32, i32, i32) {
    %c0_i32 = arith.constant 0 : i32
    %c0_i32_0 = arith.constant 0 : i32
    %c0_i32_1 = arith.constant 0 : i32
    %c0_i32_2 = arith.constant 0 : i32
    return %c0_i32, %c0_i32_0, %c0_i32_1 : i32, i32, i32
  }
  func.func @transform_4(%arg0: i32) -> (i32, i32, i32) {
    %c0_i32 = arith.constant 0 : i32
    %c0_i32_0 = arith.constant 0 : i32
    %c0_i32_1 = arith.constant 0 : i32
    %c0_i32_2 = arith.constant 0 : i32
    return %c0_i32, %c0_i32_0, %c0_i32_1 : i32, i32, i32
  }
  func.func @transform_5(%arg0: i32) -> (i32, i32) {
    %c0_i32 = arith.constant 0 : i32
    %c0_i32_0 = arith.constant 0 : i32
    %c0_i32_1 = arith.constant 0 : i32
    return %c0_i32, %c0_i32_0 : i32, i32
  }
  func.func @transform_6(%arg0: i32) -> (i32, i32) {
    %c0_i32 = arith.constant 0 : i32
    %c0_i32_0 = arith.constant 0 : i32
    %c0_i32_1 = arith.constant 0 : i32
    return %c0_i32, %c0_i32_0 : i32, i32
  }
  func.func @transform_7(%arg0: i32) -> (i32, i32) {
    %c0_i32 = arith.constant 0 : i32
    %c0_i32_0 = arith.constant 0 : i32
    return %arg0, %c0_i32 : i32, i32
  }
}

</mosaic_0001>

<llo_original>
// kernel: tpu_custom_call.1
$region0: #{tpu_custom_call.1}
  #allocation0 [shape = 'u32[]', space=smem, size = 0x4, offset = 0x4, fixed_abs, tag = 'smem constant byte address 0x4 - core index']
  #allocation1 [shape = 'u32[72,128]{1,0:T(1,128)}', space=vmem, size = 0x9000, scoped, tag = 'internal scratch']
  #allocation2 [shape = 'bf16[16,128]{1,0:T(8,128)(2,1)}', space=vmem, size = 0x1000, scoped, tag = 'scratch operand']
  %s0 = inlined_call_operand.hbm [shape: bf16[16,128], index: 0, kind: input, shape index: {}]
  %s1 = inlined_call_operand.hbm [shape: bf16[128,128], index: 1, kind: input, shape index: {}]
  %s2 = inlined_call_operand.vmem [shape: f32[1,128], index: 2, kind: input, shape index: {}]
  %s3 = inlined_call_operand.hbm [shape: bf16[2,128,128], index: 3, kind: input, shape index: {}]
  %s4 = inlined_call_operand.vmem [shape: f32[2,1,128], index: 4, kind: input, shape index: {}]
  %s5 = inlined_call_operand.hbm [shape: bf16[128,128], index: 5, kind: input, shape index: {}]
  %s6 = inlined_call_operand.vmem [shape: f32[1,128], index: 6, kind: input, shape index: {}]
  %s7 = inlined_call_operand.hbm [shape: f32[16,128], index: 7, kind: output, shape index: {}]
  %s8 = sld [smem:[#allocation0]]
  $region54: #{tpu_custom_call.1} parent=0
    _
  %s10 = ssub.s32 1, %s8
  %s11 = scalar_select 0, %s10, %s8
  $region1: #{tpu_custom_call.1} parent=0
    #allocation3 [shape = 'u8[4096]{0}', space=vmem, size = 0x1000, scoped, tag = 'input window, operand 0, single buffered']
    #allocation4 [shape = 's32[1]{0}', space=sflag, size = 0x4, scoped, tag = 'scoped memory for tpu_custom_call.1']
    #allocation5 [shape = 's32[1]{0}', space=sflag, size = 0x4, scoped, tag = 'scoped memory for tpu_custom_call.1']
    #allocation6 [shape = 'u8[32768]{0}', space=vmem, size = 0x8000, scoped, tag = 'input window, operand 1, single buffered']
    #allocation7 [shape = 's32[1]{0}', space=sflag, size = 0x4, scoped, tag = 'scoped memory for tpu_custom_call.1']
    #allocation8 [shape = 'u8[65536]{0}', space=vmem, size = 0x10000, scoped, tag = 'input window, operand 3, single buffered']
    #allocation9 [shape = 'u8[32768]{0}', space=vmem, size = 0x8000, scoped, tag = 'input window, operand 5, single buffered']
    #allocation10 [shape = 's32[1]{0}', space=sflag, size = 0x4, scoped, tag = 'scoped memory for tpu_custom_call.1']
    #allocation11 [shape = 'u8[8192]{0}', space=vmem, size = 0x2000, scoped, tag = 'output window, operand 0, single buffered']
    %12 = vsyncpa [#allocation4], 0
    %13 = vsyncpa [#allocation7], 0
    %14 = vsyncpa [#allocation10], 0
    %15 = vsyncpa [#allocation5], 0
    // Predicated region
    $region2: #{tpu_custom_call.1} parent=1 // pred_check
      _
    $region3: #{tpu_custom_call.1} parent=1 // pred_check_branch
      %17 = sbr.rel (0) target = $region5
    $region4: #{tpu_custom_call.1} parent=1 // pred_region
      %19 = vsyncadd [#allocation4], 0
      %s20 = sshll.u32 %s0, 4
      %s21 = int_to_ptr.hbm [resolvable:$true] %s20
      %s22 = sshll.u32 [#allocation3], 4
      %s23 = int_to_ptr.vmem [resolvable:$true] %s22
      %28 = dma.hbm_to_vmem [thread:$0]  %s21, 128, %s23, [#allocation4], 64, 64, 4
    $region5: #{tpu_custom_call.1} parent=1 // pred_fallthru
      _
    // Predicated region
    $region6: #{tpu_custom_call.1} parent=1 // pred_check
      _
    $region7: #{tpu_custom_call.1} parent=1 // pred_check_branch
      %30 = sbr.rel (0) target = $region9
    $region8: #{tpu_custom_call.1} parent=1 // pred_region
      %32 = vsyncadd [#allocation7], 0
      %s33 = sshll.u32 %s1, 4
      %s34 = int_to_ptr.hbm [resolvable:$true] %s33
      %s35 = sshll.u32 [#allocation6], 4
      %s36 = int_to_ptr.vmem [resolvable:$true] %s35
      %41 = dma.hbm_to_vmem [thread:$0]  %s34, 1024, %s36, [#allocation7], 64, 64, 4
    $region9: #{tpu_custom_call.1} parent=1 // pred_fallthru
      _
    // Predicated region
    $region10: #{tpu_custom_call.1} parent=1 // pred_check
      _
    $region11: #{tpu_custom_call.1} parent=1 // pred_check_branch
      %43 = sbr.rel (0) target = $region13
    $region12: #{tpu_custom_call.1} parent=1 // pred_region
      _
    $region13: #{tpu_custom_call.1} parent=1 // pred_fallthru
      _
    // Predicated region
    $region14: #{tpu_custom_call.1} parent=1 // pred_check
      _
    $region15: #{tpu_custom_call.1} parent=1 // pred_check_branch
      %45 = sbr.rel (0) target = $region17
    $region16: #{tpu_custom_call.1} parent=1 // pred_region
      %47 = vsyncadd [#allocation7], 0
      %s48 = sshll.u32 %s3, 4
      %s49 = int_to_ptr.hbm [resolvable:$true] %s48
      %s50 = sshll.u32 [#allocation8], 4
      %s51 = int_to_ptr.vmem [resolvable:$true] %s50
      %56 = dma.hbm_to_vmem [thread:$0]  %s49, 2048, %s51, [#allocation7], 64, 64, 4
    $region17: #{tpu_custom_call.1} parent=1 // pred_fallthru
      _
    // Predicated region
    $region18: #{tpu_custom_call.1} parent=1 // pred_check
      _
    $region19: #{tpu_custom_call.1} parent=1 // pred_check_branch
      %58 = sbr.rel (0) target = $region21
    $region20: #{tpu_custom_call.1} parent=1 // pred_region
      _
    $region21: #{tpu_custom_call.1} parent=1 // pred_fallthru
      _
    // Predicated region
    $region22: #{tpu_custom_call.1} parent=1 // pred_check
      _
    $region23: #{tpu_custom_call.1} parent=1 // pred_check_branch
      %60 = sbr.rel (0) target = $region25
    $region24: #{tpu_custom_call.1} parent=1 // pred_region
      %62 = vsyncadd [#allocation10], 0
      %s63 = sshll.u32 %s5, 4
      %s64 = int_to_ptr.hbm [resolvable:$true] %s63
      %s65 = sshll.u32 [#allocation9], 4
      %s66 = int_to_ptr.vmem [resolvable:$true] %s65
      %71 = dma.hbm_to_vmem [thread:$0]  %s64, 1024, %s66, [#allocation10], 64, 64, 4
    $region25: #{tpu_custom_call.1} parent=1 // pred_fallthru
      _
    // Predicated region
    $region26: #{tpu_custom_call.1} parent=1 // pred_check
      _
    $region27: #{tpu_custom_call.1} parent=1 // pred_check_branch
      %73 = sbr.rel (0) target = $region29
    $region28: #{tpu_custom_call.1} parent=1 // pred_region
      _
    $region29: #{tpu_custom_call.1} parent=1 // pred_fallthru
      _
    // Predicated region
    $region30: #{tpu_custom_call.1} parent=1 // pred_check
      _
    $region31: #{tpu_custom_call.1} parent=1 // pred_check_branch
      %75 = sbr.rel (0) target = $region33
    $region32: #{tpu_custom_call.1} parent=1 // pred_region
      %77 = dma.done [#allocation4], 128
    $region33: #{tpu_custom_call.1} parent=1 // pred_fallthru
      _
    // Predicated region
    $region34: #{tpu_custom_call.1} parent=1 // pred_check
      _
    $region35: #{tpu_custom_call.1} parent=1 // pred_check_branch
      %79 = sbr.rel (0) target = $region37
    $region36: #{tpu_custom_call.1} parent=1 // pred_region
      %81 = dma.done [#allocation7], 1024
    $region37: #{tpu_custom_call.1} parent=1 // pred_fallthru
      _
    // Predicated region
    $region38: #{tpu_custom_call.1} parent=1 // pred_check
      _
    $region39: #{tpu_custom_call.1} parent=1 // pred_check_branch
      %83 = sbr.rel (0) target = $region41
    $region40: #{tpu_custom_call.1} parent=1 // pred_region
      %85 = dma.done [#allocation7], 2048
    $region41: #{tpu_custom_call.1} parent=1 // pred_fallthru
      _
    // Predicated region
    $region42: #{tpu_custom_call.1} parent=1 // pred_check
      _
    $region43: #{tpu_custom_call.1} parent=1 // pred_check_branch
      %87 = sbr.rel (0) target = $region45
    $region44: #{tpu_custom_call.1} parent=1 // pred_region
      %89 = dma.done [#allocation10], 1024
    $region45: #{tpu_custom_call.1} parent=1 // pred_fallthru
      _
    %v90 = vld [vmem:[#allocation3] sm:$0xf]
    %v91 = vld [vmem:[#allocation3 + $0x4] sm:$0xf]
    %v92 = vld [vmem:[#allocation6] sm:$0xf]
    %v93 = vld [vmem:[#allocation6 + $0x4] sm:$0xf]
    %v94 = vld [vmem:[#allocation6 + $0x8] sm:$0xf]
    %v95 = vld [vmem:[#allocation6 + $0xc] sm:$0xf]
    %v96 = vld [vmem:[#allocation6 + $0x10] sm:$0xf]
    %v97 = vld [vmem:[#allocation6 + $0x14] sm:$0xf]
    %v98 = vld [vmem:[#allocation6 + $0x18] sm:$0xf]
    %v99 = vld [vmem:[#allocation6 + $0x1c] sm:$0xf]
    %v100 = vld [vmem:[#allocation6 + $0x20] sm:$0xf]
    %v101 = vld [vmem:[#allocation6 + $0x24] sm:$0xf]
    %v102 = vld [vmem:[#allocation6 + $0x28] sm:$0xf]
    %v103 = vld [vmem:[#allocation6 + $0x2c] sm:$0xf]
    %v104 = vld [vmem:[#allocation6 + $0x30] sm:$0xf]
    %v105 = vld [vmem:[#allocation6 + $0x34] sm:$0xf]
    %v106 = vld [vmem:[#allocation6 + $0x38] sm:$0xf]
    %v107 = vld [vmem:[#allocation6 + $0x3c] sm:$0xf]
    %v108 = vld [vmem:[%s2] sm:$0x1]
    %v110 = vperm.slane %v108, 0
    %v114 = vunpack.c.l.b16 %v90
    %v115 = vunpack.c.l.b16 %v91
    %v116 = vpack.c.b16 %v115, %v114
    %v134 = vunpack.c.l.b16 %v92
    %v135 = vunpack.c.l.b16 %v93
    %v136 = vunpack.c.l.b16 %v94
    %v137 = vunpack.c.l.b16 %v95
    %v138 = vunpack.c.l.b16 %v96
    %v139 = vunpack.c.l.b16 %v97
    %v140 = vunpack.c.l.b16 %v98
    %v141 = vunpack.c.l.b16 %v99
    %v142 = vunpack.c.l.b16 %v100
    %v143 = vunpack.c.l.b16 %v101
    %v144 = vunpack.c.l.b16 %v102
    %v145 = vunpack.c.l.b16 %v103
    %v146 = vunpack.c.l.b16 %v104
    %v147 = vunpack.c.l.b16 %v105
    %v148 = vunpack.c.l.b16 %v106
    %v149 = vunpack.c.l.b16 %v107
    %v150 = vpack.c.b16 %v135, %v134
    %v151 = vpack.c.b16 %v137, %v136
    %v152 = vpack.c.b16 %v139, %v138
    %v153 = vpack.c.b16 %v141, %v140
    %v154 = vpack.c.b16 %v143, %v142
    %v155 = vpack.c.b16 %v145, %v144
    %v156 = vpack.c.b16 %v147, %v146
    %v157 = vpack.c.b16 %v149, %v148
    %166 = vmatpush.bf16.msra.mxu0 %v157
    %167 = vmatpush.bf16.msra.mxu0 %v156
    %168 = vmatpush.bf16.msra.mxu0 %v155
    %169 = vmatpush.bf16.msra.mxu0 %v154
    %170 = vmatpush.bf16.msra.mxu0 %v153
    %171 = vmatpush.bf16.msra.mxu0 %v152
    %172 = vmatpush.bf16.msra.mxu0 %v151
    %173 = vmatpush.bf16.msra.mxu0 %v150
    %174 = vmatmul.bf16.gmra.mxu0 %v116
    %v175 = vpop.f32.mrf.mxu0
    %v176 = vadd.f32 %v110, %v175
    %v177 = vpop.f32.mrf.mxu0
    %v178 = vadd.f32 %v110, %v177
    %179 = vdwg.mxu0
    %v180 = vtanh.pop %v176
    %v181 = vtanh.pop %v178
    %v182 = vpack.c.bf16 %v180, %v180
    %v183 = vpack.c.bf16 %v181, %v181
    %184 = vst [vmem:[#allocation2] sm:$0xf] %v182
    %185 = vst [vmem:[#allocation2 + $0x4] sm:$0xf] %v183
    %v186 = vld [vmem:[#allocation2] sm:$0xf]
    %v187 = vld [vmem:[#allocation2 + $0x4] sm:$0xf]
    %v188 = vld [vmem:[#allocation8] sm:$0xf]
    %v189 = vld [vmem:[#allocation8 + $0x4] sm:$0xf]
    %v190 = vld [vmem:[#allocation8 + $0x8] sm:$0xf]
    %v191 = vld [vmem:[#allocation8 + $0xc] sm:$0xf]
    %v192 = vld [vmem:[#allocation8 + $0x10] sm:$0xf]
    %v193 = vld [vmem:[#allocation8 + $0x14] sm:$0xf]
    %v194 = vld [vmem:[#allocation8 + $0x18] sm:$0xf]
    %v195 = vld [vmem:[#allocation8 + $0x1c] sm:$0xf]
    %v196 = vld [vmem:[#allocation8 + $0x20] sm:$0xf]
    %v197 = vld [vmem:[#allocation8 + $0x24] sm:$0xf]
    %v198 = vld [vmem:[#allocation8 + $0x28] sm:$0xf]
    %v199 = vld [vmem:[#allocation8 + $0x2c] sm:$0xf]
    %v200 = vld [vmem:[#allocation8 + $0x30] sm:$0xf]
    %v201 = vld [vmem:[#allocation8 + $0x34] sm:$0xf]
    %v202 = vld [vmem:[#allocation8 + $0x38] sm:$0xf]
    %v203 = vld [vmem:[#allocation8 + $0x3c] sm:$0xf]
    %v204 = vld [vmem:[%s4] sm:$0x1]
    %v206 = vperm.slane %v204, 0
    %v210 = vunpack.c.l.b16 %v186
    %v211 = vunpack.c.l.b16 %v187
    %v212 = vpack.c.b16 %v211, %v210
    %v230 = vunpack.c.l.b16 %v188
    %v231 = vunpack.c.l.b16 %v189
    %v232 = vunpack.c.l.b16 %v190
    %v233 = vunpack.c.l.b16 %v191
    %v234 = vunpack.c.l.b16 %v192
    %v235 = vunpack.c.l.b16 %v193
    %v236 = vunpack.c.l.b16 %v194
    %v237 = vunpack.c.l.b16 %v195
    %v238 = vunpack.c.l.b16 %v196
    %v239 = vunpack.c.l.b16 %v197
    %v240 = vunpack.c.l.b16 %v198
    %v241 = vunpack.c.l.b16 %v199
    %v242 = vunpack.c.l.b16 %v200
    %v243 = vunpack.c.l.b16 %v201
    %v244 = vunpack.c.l.b16 %v202
    %v245 = vunpack.c.l.b16 %v203
    %v246 = vpack.c.b16 %v231, %v230
    %v247 = vpack.c.b16 %v233, %v232
    %v248 = vpack.c.b16 %v235, %v234
    %v249 = vpack.c.b16 %v237, %v236
    %v250 = vpack.c.b16 %v239, %v238
    %v251 = vpack.c.b16 %v241, %v240
    %v252 = vpack.c.b16 %v243, %v242
    %v253 = vpack.c.b16 %v245, %v244
    %262 = vmatpush.bf16.msra.mxu0 %v253
    %263 = vmatpush.bf16.msra.mxu0 %v252
    %264 = vmatpush.bf16.msra.mxu0 %v251
    %265 = vmatpush.bf16.msra.mxu0 %v250
    %266 = vmatpush.bf16.msra.mxu0 %v249
    %267 = vmatpush.bf16.msra.mxu0 %v248
    %268 = vmatpush.bf16.msra.mxu0 %v247
    %269 = vmatpush.bf16.msra.mxu0 %v246
    %270 = vmatmul.bf16.gmra.mxu0 %v212
    %v271 = vpop.f32.mrf.mxu0
    %v272 = vadd.f32 %v206, %v271
    %v273 = vpop.f32.mrf.mxu0
    %v274 = vadd.f32 %v206, %v273
    %275 = vdwg.mxu0
    %v276 = vtanh.pop %v272
    %v277 = vtanh.pop %v274
    %v278 = vpack.c.bf16 %v276, %v276
    %v279 = vpack.c.bf16 %v277, %v277
    %280 = vst [vmem:[#allocation2] sm:$0xf] %v278
    %281 = vst [vmem:[#allocation2 + $0x4] sm:$0xf] %v279
    %v282 = vld [vmem:[#allocation2] sm:$0xf]
    %v283 = vld [vmem:[#allocation2 + $0x4] sm:$0xf]
    %s284 = scalar_lea.vmem [#allocation8], 64
    %v285 = vld [vmem:[%s284] sm:$0xf]
    %v286 = vld [vmem:[%s284 + $0x4] sm:$0xf]
    %v287 = vld [vmem:[%s284 + $0x8] sm:$0xf]
    %v288 = vld [vmem:[%s284 + $0xc] sm:$0xf]
    %v289 = vld [vmem:[%s284 + $0x10] sm:$0xf]
    %v290 = vld [vmem:[%s284 + $0x14] sm:$0xf]
    %v291 = vld [vmem:[%s284 + $0x18] sm:$0xf]
    %v292 = vld [vmem:[%s284 + $0x1c] sm:$0xf]
    %v293 = vld [vmem:[%s284 + $0x20] sm:$0xf]
    %v294 = vld [vmem:[%s284 + $0x24] sm:$0xf]
    %v295 = vld [vmem:[%s284 + $0x28] sm:$0xf]
    %v296 = vld [vmem:[%s284 + $0x2c] sm:$0xf]
    %v297 = vld [vmem:[%s284 + $0x30] sm:$0xf]
    %v298 = vld [vmem:[%s284 + $0x34] sm:$0xf]
    %v299 = vld [vmem:[%s284 + $0x38] sm:$0xf]
    %v300 = vld [vmem:[%s284 + $0x3c] sm:$0xf]
    %s301 = scalar_lea.vmem %s4, 1
    %v302 = vld [vmem:[%s301] sm:$0x1]
    %v304 = vperm.slane %v302, 0
    %v308 = vunpack.c.l.b16 %v282
    %v309 = vunpack.c.l.b16 %v283
    %v310 = vpack.c.b16 %v309, %v308
    %v328 = vunpack.c.l.b16 %v285
    %v329 = vunpack.c.l.b16 %v286
    %v330 = vunpack.c.l.b16 %v287
    %v331 = vunpack.c.l.b16 %v288
    %v332 = vunpack.c.l.b16 %v289
    %v333 = vunpack.c.l.b16 %v290
    %v334 = vunpack.c.l.b16 %v291
    %v335 = vunpack.c.l.b16 %v292
    %v336 = vunpack.c.l.b16 %v293
    %v337 = vunpack.c.l.b16 %v294
    %v338 = vunpack.c.l.b16 %v295
    %v339 = vunpack.c.l.b16 %v296
    %v340 = vunpack.c.l.b16 %v297
    %v341 = vunpack.c.l.b16 %v298
    %v342 = vunpack.c.l.b16 %v299
    %v343 = vunpack.c.l.b16 %v300
    %v344 = vpack.c.b16 %v329, %v328
    %v345 = vpack.c.b16 %v331, %v330
    %v346 = vpack.c.b16 %v333, %v332
    %v347 = vpack.c.b16 %v335, %v334
    %v348 = vpack.c.b16 %v337, %v336
    %v349 = vpack.c.b16 %v339, %v338
    %v350 = vpack.c.b16 %v341, %v340
    %v351 = vpack.c.b16 %v343, %v342
    %360 = vmatpush.bf16.msra.mxu0 %v351
    %361 = vmatpush.bf16.msra.mxu0 %v350
    %362 = vmatpush.bf16.msra.mxu0 %v349
    %363 = vmatpush.bf16.msra.mxu0 %v348
    %364 = vmatpush.bf16.msra.mxu0 %v347
    %365 = vmatpush.bf16.msra.mxu0 %v346
    %366 = vmatpush.bf16.msra.mxu0 %v345
    %367 = vmatpush.bf16.msra.mxu0 %v344
    %368 = vmatmul.bf16.gmra.mxu0 %v310
    %v369 = vpop.f32.mrf.mxu0
    %v370 = vadd.f32 %v304, %v369
    %v371 = vpop.f32.mrf.mxu0
    %v372 = vadd.f32 %v304, %v371
    %373 = vdwg.mxu0
    %v374 = vtanh.pop %v370
    %v375 = vtanh.pop %v372
    %v376 = vpack.c.bf16 %v374, %v374
    %v377 = vpack.c.bf16 %v375, %v375
    %378 = vst [vmem:[#allocation2] sm:$0xf] %v376
    %379 = vst [vmem:[#allocation2 + $0x4] sm:$0xf] %v377
    %v380 = vld [vmem:[#allocation2] sm:$0xf]
    %v381 = vld [vmem:[#allocation2 + $0x4] sm:$0xf]
    %v382 = vld [vmem:[#allocation9] sm:$0xf]
    %v383 = vld [vmem:[#allocation9 + $0x4] sm:$0xf]
    %v384 = vld [vmem:[#allocation9 + $0x8] sm:$0xf]
    %v385 = vld [vmem:[#allocation9 + $0xc] sm:$0xf]
    %v386 = vld [vmem:[#allocation9 + $0x10] sm:$0xf]
    %v387 = vld [vmem:[#allocation9 + $0x14] sm:$0xf]
    %v388 = vld [vmem:[#allocation9 + $0x18] sm:$0xf]
    %v389 = vld [vmem:[#allocation9 + $0x1c] sm:$0xf]
    %v390 = vld [vmem:[#allocation9 + $0x20] sm:$0xf]
    %v391 = vld [vmem:[#allocation9 + $0x24] sm:$0xf]
    %v392 = vld [vmem:[#allocation9 + $0x28] sm:$0xf]
    %v393 = vld [vmem:[#allocation9 + $0x2c] sm:$0xf]
    %v394 = vld [vmem:[#allocation9 + $0x30] sm:$0xf]
    %v395 = vld [vmem:[#allocation9 + $0x34] sm:$0xf]
    %v396 = vld [vmem:[#allocation9 + $0x38] sm:$0xf]
    %v397 = vld [vmem:[#allocation9 + $0x3c] sm:$0xf]
    %v398 = vld [vmem:[%s6] sm:$0x1]
    %v400 = vperm.slane %v398, 0
    %v404 = vunpack.c.l.b16 %v380
    %v405 = vunpack.c.l.b16 %v381
    %v406 = vpack.c.b16 %v405, %v404
    %v424 = vunpack.c.l.b16 %v382
    %v425 = vunpack.c.l.b16 %v383
    %v426 = vunpack.c.l.b16 %v384
    %v427 = vunpack.c.l.b16 %v385
    %v428 = vunpack.c.l.b16 %v386
    %v429 = vunpack.c.l.b16 %v387
    %v430 = vunpack.c.l.b16 %v388
    %v431 = vunpack.c.l.b16 %v389
    %v432 = vunpack.c.l.b16 %v390
    %v433 = vunpack.c.l.b16 %v391
    %v434 = vunpack.c.l.b16 %v392
    %v435 = vunpack.c.l.b16 %v393
    %v436 = vunpack.c.l.b16 %v394
    %v437 = vunpack.c.l.b16 %v395
    %v438 = vunpack.c.l.b16 %v396
    %v439 = vunpack.c.l.b16 %v397
    %v440 = vpack.c.b16 %v425, %v424
    %v441 = vpack.c.b16 %v427, %v426
    %v442 = vpack.c.b16 %v429, %v428
    %v443 = vpack.c.b16 %v431, %v430
    %v444 = vpack.c.b16 %v433, %v432
    %v445 = vpack.c.b16 %v435, %v434
    %v446 = vpack.c.b16 %v437, %v436
    %v447 = vpack.c.b16 %v439, %v438
    %456 = vmatpush.bf16.msra.mxu0 %v447
    %457 = vmatpush.bf16.msra.mxu0 %v446
    %458 = vmatpush.bf16.msra.mxu0 %v445
    %459 = vmatpush.bf16.msra.mxu0 %v444
    %460 = vmatpush.bf16.msra.mxu0 %v443
    %461 = vmatpush.bf16.msra.mxu0 %v442
    %462 = vmatpush.bf16.msra.mxu0 %v441
    %463 = vmatpush.bf16.msra.mxu0 %v440
    %464 = vmatmul.bf16.gmra.mxu0 %v406
    %v465 = vpop.f32.mrf.mxu0
    %v466 = vadd.f32 %v400, %v465
    %v467 = vpop.f32.mrf.mxu0
    %v468 = vadd.f32 %v400, %v467
    %469 = vdwg.mxu0
    %470 = vst [vmem:[#allocation11] sm:$0xff] %v466
    %471 = vst [vmem:[#allocation11 + $0x8] sm:$0xff] %v468
    // Predicated region
    $region46: #{tpu_custom_call.1} parent=1 // pred_check
      _
    $region47: #{tpu_custom_call.1} parent=1 // pred_check_branch
      %473 = sbr.rel (0) target = $region49
    $region48: #{tpu_custom_call.1} parent=1 // pred_region
      %475 = vsyncadd [#allocation5], 0
      %s476 = sshll.u32 [#allocation11], 4
      %s477 = int_to_ptr.vmem [resolvable:$true] %s476
      %s478 = sshll.u32 %s7, 4
      %s479 = int_to_ptr.hbm [resolvable:$true] %s478
      %484 = dma.vmem_to_hbm [thread:$0]  %s477, 256, %s479, [#allocation5], 128, 128, 8
    $region49: #{tpu_custom_call.1} parent=1 // pred_fallthru
      _
    // Predicated region
    $region50: #{tpu_custom_call.1} parent=1 // pred_check
      _
    $region51: #{tpu_custom_call.1} parent=1 // pred_check_branch
      %486 = sbr.rel (0) target = $region53
    $region52: #{tpu_custom_call.1} parent=1 // pred_region
      %488 = dma.done [#allocation5], 256
    $region53: #{tpu_custom_call.1} parent=1 // pred_fallthru
      _
    %489 = vsyncpa [#allocation4], 1
    %490 = vsyncpa [#allocation7], 1
    %491 = vsyncpa [#allocation10], 1
    %492 = vsyncpa [#allocation5], 1

</llo_original>
